<compile_context>
chip_gen: v6e
topology: v6e:2x2x1
jax: 0.10.0
libtpu: 0.0.40
codegen_flags: <defaults>
</compile_context>

<pallas_src>
import functools

import jax
import jax.numpy as jnp
from jax import lax
from jax.experimental import pallas as pl
from jax.experimental.pallas import tpu as pltpu

# Deterministic synthetic "penalty_model": predict(d) = PEN_W * d + PEN_B
# TODO(synk): the real penalty_model is an arbitrary sklearn regressor; only a linear
# predict() is implemented here.
PEN_W = 0.1
PEN_B = 0.05
ALPHA = 1.0

_LANES = 128
_MAX_BLOCK_ROWS = 4096            # 4096 x 128 f32 = 2 MiB per input per block
_NEG_LARGE = -1.0e30              # "-inf" stand-in that stays NaN-free under subtraction
_VMEM_LIMIT = 32 * 1024 * 1024    # >= scoped default on all gens, <= physical on all gens


def _round_up(a, m):
    return ((a + m - 1) // m) * m


def _sublane_multiple(dtype):
    # f32 -> 8, bf16/f16 -> 16, int8/fp8 -> 32 (packed-sublane layouts).
    bits = jnp.dtype(dtype).itemsize * 8
    return max(8, 256 // max(bits, 1))


@functools.lru_cache(maxsize=None)
def _num_tensorcores():
    # v7x has 2 TensorCores per chip; v5e/v6e have 1.  Fallback of 2 is harmless on
    # single-core parts (one extra tiny init per group at most).
    try:
        info = pltpu.get_tpu_info()
        for attr in ("num_cores", "core_count", "num_tensorcores", "tensor_core_count"):
            v = getattr(info, attr, None)
            if isinstance(v, int) and 1 <= v <= 16:
                return v
    except Exception:
        pass
    return 2


def _stable_bce(x, t):
    # Fused, numerically-stable BCE-with-logits: max(x,0) - x*t + log1p(exp(-|x|)).
    # min(., 100) mimics torch's per-log-term clamp at -100 (exact for 0/1 targets).
    bce = jnp.maximum(x, 0.0) - x * t + jnp.log1p(jnp.exp(-jnp.abs(x)))
    return jnp.minimum(bce, 100.0)


# --------------------------------------------------------------------------------
# Kernels
# --------------------------------------------------------------------------------
def _plain_kernel(x_ref, t_ref, sum_ref, *, n, block_rows, steps):
    g = pl.program_id(0)          # parallel group axis (one per TensorCore)
    j = pl.program_id(1)          # reduction step within the group
    blk = g * steps + j

    @pl.when(j == 0)
    def _init():
        sum_ref[...] = jnp.zeros_like(sum_ref)

    x = x_ref[...].astype(jnp.float32)
    t = t_ref[...].astype(jnp.float32)
    bce = _stable_bce(x, t)

    block_elems = block_rows * _LANES
    in_bounds = (blk + 1) * block_elems <= n        # n < 2**31 assumed

    @pl.when(in_bounds)
    def _fast():
        sum_ref[...] += jnp.sum(bce, axis=0, keepdims=True)[None]

    @pl.when(jnp.logical_not(in_bounds))
    def _masked():
        row = lax.broadcasted_iota(jnp.int32, bce.shape, 0)
        col = lax.broadcasted_iota(jnp.int32, bce.shape, 1)
        flat = (blk * block_rows + row) * _LANES + col
        bce_m = jnp.where(flat < n, bce, 0.0)
        sum_ref[...] += jnp.sum(bce_m, axis=0, keepdims=True)[None]


def _weighted_kernel(x_ref, t_ref, d_ref, sum_ref, m_ref, l_ref, s_ref, *,
                     n, block_rows, steps, pen_w, pen_b):
    g = pl.program_id(0)
    j = pl.program_id(1)
    blk = g * steps + j

    @pl.when(j == 0)
    def _init():
        sum_ref[...] = jnp.zeros_like(sum_ref)
        m_ref[...] = jnp.full_like(m_ref, _NEG_LARGE)
        l_ref[...] = jnp.zeros_like(l_ref)
        s_ref[...] = jnp.zeros_like(s_ref)

    x = x_ref[...].astype(jnp.float32)
    t = t_ref[...].astype(jnp.float32)
    d = d_ref[...].astype(jnp.float32)

    bce = _stable_bce(x, t)
    pen = 1.0 - (pen_w * d + pen_b)          # 1 - penalty_model.predict(d)

    def accumulate(bce_v, pen_v, e_mask):
        # Per-lane online softmax (flash-attention style rescale).  Only sublane
        # (axis=0) reductions here; the cross-lane reduction happens outside.
        sum_ref[...] += jnp.sum(bce_v, axis=0, keepdims=True)[None]
        m_prev = m_ref[...]                                      # (1,1,LANES)
        m_blk = jnp.max(pen_v, axis=0, keepdims=True)[None]      # (1,1,LANES)
        m_new = jnp.maximum(m_prev, m_blk)
        corr = jnp.exp(m_prev - m_new)
        e = jnp.exp(pen_v - m_new[0])                            # (rows, LANES)
        if e_mask is not None:
            # Guard: padded elements must contribute exactly 0 to the denominator
            # even when the whole block is padding (pen == m_new == _NEG_LARGE).
            e = jnp.where(e_mask, e, 0.0)
        l_ref[...] = corr * l_ref[...] + jnp.sum(e, axis=0, keepdims=True)[None]
        s_ref[...] = corr * s_ref[...] + jnp.sum(bce_v * e, axis=0, keepdims=True)[None]
        m_ref[...] = m_new

    block_elems = block_rows * _LANES
    in_bounds = (blk + 1) * block_elems <= n        # n < 2**31 assumed

    @pl.when(in_bounds)
    def _fast():
        accumulate(bce, pen, None)

    @pl.when(jnp.logical_not(in_bounds))
    def _masked():
        row = lax.broadcasted_iota(jnp.int32, bce.shape, 0)
        col = lax.broadcasted_iota(jnp.int32, bce.shape, 1)
        flat = (blk * block_rows + row) * _LANES + col
        mask = flat < n
        accumulate(jnp.where(mask, bce, 0.0),
                   jnp.where(mask, pen, _NEG_LARGE),
                   mask)


# --------------------------------------------------------------------------------
# Wrapper
# --------------------------------------------------------------------------------
def custom_bce_with_logits_loss(outputs, targets, distances, epoch, total_epochs,
                                start, *, pen_w=PEN_W, pen_b=PEN_B, alpha=ALPHA):
    """JAX/Pallas equivalent of CustomBCEWithLogitsLoss.forward.

    `epoch`, `total_epochs`, `start` are Python ints (as in the PyTorch code the
    branch is resolved on the host).  Returns a tuple of two f32 scalars.
    """
    del total_epochs  # unused by the reference forward as well
    x = jnp.ravel(jnp.asarray(outputs))
    t = jnp.ravel(jnp.asarray(targets))
    d = jnp.ravel(jnp.asarray(distances))
    n = x.shape[0]
    assert t.shape[0] == n and d.shape[0] == n and n > 0

    compute_weighted = bool(epoch > start)

    # --- zero-copy (rows, 128) view of the flat inputs ------------------------
    rows = pl.cdiv(n, _LANES)

    def _as_rows(a):
        if n % _LANES == 0:
            return a.reshape(rows, _LANES)       # metadata-only (bitcast) reshape
        # TODO(synk): non-multiple-of-128 sizes pay one small pad copy (<=127 pad elems).
        return jnp.pad(a, (0, rows * _LANES - n)).reshape(rows, _LANES)

    inputs = [x, t] + ([d] if compute_weighted else [])
    inputs2 = [_as_rows(a) for a in inputs]

    # --- tiling ----------------------------------------------------------------
    sub = max(_sublane_multiple(a.dtype) for a in inputs)
    nblk = pl.cdiv(rows, _MAX_BLOCK_ROWS)
    groups = max(1, min(_num_tensorcores(), nblk))       # "parallel" axis
    nblk = _round_up(nblk, groups)
    block_rows = _round_up(pl.cdiv(rows, nblk), sub)      # even split, sublane-aligned
    steps = nblk // groups
    last_blk = pl.cdiv(rows, block_rows) - 1              # last block with any valid rows

    def in_map(g, j):
        # Clamp so a (rare, huge-N) fully-padded trailing block never issues a fully
        # out-of-bounds DMA; its contents are discarded by the in-kernel mask anyway.
        return (jnp.minimum(g * steps + j, last_blk), 0)

    out_map = lambda g, j: (g, 0, 0)
    part_shape = jax.ShapeDtypeStruct((groups, 1, _LANES), jnp.float32)
    part_spec = pl.BlockSpec((1, 1, _LANES), out_map)
    in_spec = pl.BlockSpec((block_rows, _LANES), in_map)
    cparams = pltpu.CompilerParams(
        dimension_semantics=("parallel", "arbitrary"),
        vmem_limit_bytes=_VMEM_LIMIT)

    if not compute_weighted:
        kernel = functools.partial(_plain_kernel, n=n, block_rows=block_rows, steps=steps)
        p_sum = pl.pallas_call(
            kernel,
            out_shape=part_shape,
            grid_spec=pltpu.PrefetchScalarGridSpec(
                num_scalar_prefetch=0, grid=(groups, steps),
                in_specs=[in_spec] * 2, out_specs=part_spec),
            compiler_params=cparams,
        )(*inputs2)
        bce_mean = jnp.sum(p_sum) / jnp.float32(n)
        return bce_mean, bce_mean

    kernel = functools.partial(
        _weighted_kernel, n=n, block_rows=block_rows, steps=steps,
        pen_w=float(pen_w), pen_b=float(pen_b))
    p_sum, p_m, p_l, p_s = pl.pallas_call(
        kernel,
        out_shape=(part_shape, part_shape, part_shape, part_shape),
        grid_spec=pltpu.PrefetchScalarGridSpec(
            num_scalar_prefetch=0, grid=(groups, steps),
            in_specs=[in_spec] * 3,
            out_specs=(part_spec, part_spec, part_spec, part_spec)),
        compiler_params=cparams,
    )(*inputs2)

    bce_mean = jnp.sum(p_sum) / jnp.float32(n)

    # Combine the per-(group, lane) online-softmax partials (tiny, plain JAX).
    # Lanes/groups that never saw valid data hold m = -1e30 -> scale underflows to 0.
    m_glob = jnp.max(p_m)
    scale = jnp.exp(p_m - m_glob)
    denom = jnp.sum(p_l * scale)
    numer = jnp.sum(p_s * scale)
    weighted = (numer / denom) * jnp.float32(alpha)
    return bce_mean, weighted


# --------------------------------------------------------------------------------
# Pure-JAX reference (for a quick correctness check in __main__)
# --------------------------------------------------------------------------------
def _reference(outputs, targets, distances, epoch, start,
               pen_w=PEN_W, pen_b=PEN_B, alpha=ALPHA):
    x = jnp.ravel(outputs).astype(jnp.float32)
    t = jnp.ravel(targets).astype(jnp.float32)
    d = jnp.ravel(distances).astype(jnp.float32)
    p = jax.nn.sigmoid(x)
    bce = -(t * jnp.maximum(jnp.log(p), -100.0)
            + (1.0 - t) * jnp.maximum(jnp.log1p(-p), -100.0))
    mean = jnp.mean(bce)
    if epoch <= start:
        return mean, mean
    pen = 1.0 - (pen_w * d + pen_b)
    w = jax.nn.softmax(pen)
    return mean, jnp.sum(bce * w) * alpha


if __name__ == "__main__":
    key = jax.random.PRNGKey(0)
    k1, k2, k3 = jax.random.split(key, 3)

    # Small shapes: outputs (batch=2, 64) -> view(-1) gives N=128 elements.
    outputs = jax.random.normal(k1, (2, 64), dtype=jnp.float32)
    targets = jax.random.bernoulli(k2, 0.5, (128,)).astype(jnp.float32)
    distances = jax.random.uniform(k3, (128,), dtype=jnp.float32,
                                   minval=0.0, maxval=5.0)

    # epoch > start branch: exercises mean + penalty-weighted sum.
    bce_mean, weighted = custom_bce_with_logits_loss(
        outputs, targets, distances, epoch=5, total_epochs=10, start=2)
    jax.block_until_ready(bce_mean)
    jax.block_until_ready(weighted)

    # epoch <= start branch.
    m0, m1 = custom_bce_with_logits_loss(
        outputs, targets, distances, epoch=1, total_epochs=10, start=2)
    jax.block_until_ready(m0)
    jax.block_until_ready(m1)

    # Lightweight correctness check against a pure-JAX reference.
    r_mean, r_weighted = _reference(outputs, targets, distances, epoch=5, start=2)
    assert jnp.allclose(bce_mean, r_mean, rtol=2e-5, atol=1e-5)
    assert jnp.allclose(weighted, r_weighted, rtol=2e-5, atol=1e-5)
    r0, _ = _reference(outputs, targets, distances, epoch=1, start=2)
    assert jnp.allclose(m0, r0, rtol=2e-5, atol=1e-5)
    assert jnp.allclose(m1, r0, rtol=2e-5, atol=1e-5)

    print("KERNEL_OK")
</pallas_src>

<mosaic_0001>
module attributes {stable_mosaic.version = 11 : i64} {
  func.func @_weighted_kernel(%arg0: i32, %arg1: i32, %arg2: memref<8x128xf32, #tpu.memory_space<vmem>>, %arg3: memref<8x128xf32, #tpu.memory_space<vmem>>, %arg4: memref<8x128xf32, #tpu.memory_space<vmem>>, %arg5: memref<1x1x128xf32, #tpu.memory_space<vmem>>, %arg6: memref<1x1x128xf32, #tpu.memory_space<vmem>>, %arg7: memref<1x1x128xf32, #tpu.memory_space<vmem>>, %arg8: memref<1x1x128xf32, #tpu.memory_space<vmem>>) attributes {dimension_semantics = [#tpu.dimension_semantics<parallel>, #tpu.dimension_semantics<arbitrary>], iteration_bounds = array<i64: 1, 1>, scalar_prefetch = 0 : i64, scratch_operands = 0 : i64, tpu.core_type = #tpu.core_type<tc>, window_params = [{transform_indices = @transform_0, window_bounds = array<i64: 8, 128>}, {transform_indices = @transform_1, window_bounds = array<i64: 8, 128>}, {transform_indices = @transform_2, window_bounds = array<i64: 8, 128>}, {transform_indices = @transform_3, window_bounds = array<i64: 1, 1, 128>}, {transform_indices = @transform_4, window_bounds = array<i64: 1, 1, 128>}, {transform_indices = @transform_5, window_bounds = array<i64: 1, 1, 128>}, {transform_indices = @transform_6, window_bounds = array<i64: 1, 1, 128>}]} {
    %c1_i32 = arith.constant 1 : i32
    %0 = arith.muli %arg0, %c1_i32 : i32
    %1 = arith.addi %0, %arg1 : i32
    %c0_i32 = arith.constant 0 : i32
    %2 = arith.cmpi eq, %arg1, %c0_i32 : i32
    %3 = arith.extui %2 : i1 to i32
    %c0_i32_0 = arith.constant 0 : i32
    %4 = arith.cmpi ne, %3, %c0_i32_0 : i32
    scf.if %4 {
      %cst_14 = arith.constant 0.000000e+00 : f32
      %34 = vector.broadcast %cst_14 : f32 to vector<1x1x128xf32>
      %c0_15 = arith.constant 0 : index
      %c0_16 = arith.constant 0 : index
      %c0_17 = arith.constant 0 : index
      %35 = vector.load %arg5[%c0_15, %c0_16, %c0_17] : memref<1x1x128xf32, #tpu.memory_space<vmem>>, vector<1x1x128xf32>
      tpu.vector_store %arg5[%c0_15, %c0_16, %c0_17], %34 {strides = array<i32>} : memref<1x1x128xf32, #tpu.memory_space<vmem>>, vector<1x1x128xf32>,
      %cst_18 = arith.constant -1.000000e+30 : f32
      %36 = vector.broadcast %cst_18 : f32 to vector<1x1x128xf32>
      %c0_19 = arith.constant 0 : index
      %c0_20 = arith.constant 0 : index
      %c0_21 = arith.constant 0 : index
      %37 = vector.load %arg6[%c0_19, %c0_20, %c0_21] : memref<1x1x128xf32, #tpu.memory_space<vmem>>, vector<1x1x128xf32>
      tpu.vector_store %arg6[%c0_19, %c0_20, %c0_21], %36 {strides = array<i32>} : memref<1x1x128xf32, #tpu.memory_space<vmem>>, vector<1x1x128xf32>,
      %cst_22 = arith.constant 0.000000e+00 : f32
      %38 = vector.broadcast %cst_22 : f32 to vector<1x1x128xf32>
      %c0_23 = arith.constant 0 : index
      %c0_24 = arith.constant 0 : index
      %c0_25 = arith.constant 0 : index
      %39 = vector.load %arg7[%c0_23, %c0_24, %c0_25] : memref<1x1x128xf32, #tpu.memory_space<vmem>>, vector<1x1x128xf32>
      tpu.vector_store %arg7[%c0_23, %c0_24, %c0_25], %38 {strides = array<i32>} : memref<1x1x128xf32, #tpu.memory_space<vmem>>, vector<1x1x128xf32>,
      %cst_26 = arith.constant 0.000000e+00 : f32
      %40 = vector.broadcast %cst_26 : f32 to vector<1x1x128xf32>
      %c0_27 = arith.constant 0 : index
      %c0_28 = arith.constant 0 : index
      %c0_29 = arith.constant 0 : index
      %41 = vector.load %arg8[%c0_27, %c0_28, %c0_29] : memref<1x1x128xf32, #tpu.memory_space<vmem>>, vector<1x1x128xf32>
      tpu.vector_store %arg8[%c0_27, %c0_28, %c0_29], %40 {strides = array<i32>} : memref<1x1x128xf32, #tpu.memory_space<vmem>>, vector<1x1x128xf32>,
    } else {
    }
    %c0 = arith.constant 0 : index
    %c0_1 = arith.constant 0 : index
    %5 = vector.load %arg2[%c0, %c0_1] : memref<8x128xf32, #tpu.memory_space<vmem>>, vector<8x128xf32>
    %c0_2 = arith.constant 0 : index
    %c0_3 = arith.constant 0 : index
    %6 = vector.load %arg3[%c0_2, %c0_3] : memref<8x128xf32, #tpu.memory_space<vmem>>, vector<8x128xf32>
    %c0_4 = arith.constant 0 : index
    %c0_5 = arith.constant 0 : index
    %7 = vector.load %arg4[%c0_4, %c0_5] : memref<8x128xf32, #tpu.memory_space<vmem>>, vector<8x128xf32>
    %cst = arith.constant 0.000000e+00 : f32
    %8 = vector.broadcast %cst : f32 to vector<8x128xf32>
    %9 = arith.maximumf %5, %8 : vector<8x128xf32>
    %10 = arith.mulf %5, %6 : vector<8x128xf32>
    %11 = arith.subf %9, %10 : vector<8x128xf32>
    %12 = math.absf %5 : vector<8x128xf32>
    %cst_6 = arith.constant 0.000000e+00 : f32
    %13 = vector.broadcast %cst_6 : f32 to vector<8x128xf32>
    %14 = arith.subf %13, %12 : vector<8x128xf32>
    %15 = math.exp %14 : vector<8x128xf32>
    %16 = math.log1p %15 : vector<8x128xf32>
    %17 = arith.addf %11, %16 : vector<8x128xf32>
    %cst_7 = arith.constant 1.000000e+02 : f32
    %18 = vector.broadcast %cst_7 : f32 to vector<8x128xf32>
    %19 = arith.minimumf %17, %18 : vector<8x128xf32>
    %cst_8 = arith.constant 1.000000e-01 : f32
    %20 = vector.broadcast %cst_8 : f32 to vector<8x128xf32>
    %21 = arith.mulf %20, %7 : vector<8x128xf32>
    %cst_9 = arith.constant 5.000000e-02 : f32
    %22 = vector.broadcast %cst_9 : f32 to vector<8x128xf32>
    %23 = arith.addf %21, %22 : vector<8x128xf32>
    %cst_10 = arith.constant 1.000000e+00 : f32
    %24 = vector.broadcast %cst_10 : f32 to vector<8x128xf32>
    %25 = arith.subf %24, %23 : vector<8x128xf32>
    %c1_i32_11 = arith.constant 1 : i32
    %26 = arith.addi %1, %c1_i32_11 : i32
    %c1024_i32 = arith.constant 1024 : i32
    %27 = arith.muli %26, %c1024_i32 : i32
    %c128_i32 = arith.constant 128 : i32
    %28 = arith.cmpi sle, %27, %c128_i32 : i32
    %29 = arith.extui %28 : i1 to i32
    %c0_i32_12 = arith.constant 0 : i32
    %30 = arith.cmpi ne, %29, %c0_i32_12 : i32
    scf.if %30 {
      %c0_14 = arith.constant 0 : index
      %c0_15 = arith.constant 0 : index
      %c0_16 = arith.constant 0 : index
      %34 = vector.load %arg5[%c0_14, %c0_15, %c0_16] : memref<1x1x128xf32, #tpu.memory_space<vmem>>, vector<1x1x128xf32>
      %cst_17 = arith.constant dense<0.000000e+00> : vector<128xf32>
      %35 = vector.multi_reduction <add>, %19, %cst_17 [0] : vector<8x128xf32> to vector<128xf32>
      %36 = vector.shape_cast %35 : vector<128xf32> to vector<1x128xf32>
      %37 = vector.shape_cast %36 : vector<1x128xf32> to vector<1x1x128xf32>
      %38 = arith.addf %34, %37 : vector<1x1x128xf32>
      %c0_18 = arith.constant 0 : index
      %c0_19 = arith.constant 0 : index
      %c0_20 = arith.constant 0 : index
      %39 = vector.load %arg5[%c0_18, %c0_19, %c0_20] : memref<1x1x128xf32, #tpu.memory_space<vmem>>, vector<1x1x128xf32>
      tpu.vector_store %arg5[%c0_18, %c0_19, %c0_20], %38 {strides = array<i32>} : memref<1x1x128xf32, #tpu.memory_space<vmem>>, vector<1x1x128xf32>,
      %c0_21 = arith.constant 0 : index
      %c0_22 = arith.constant 0 : index
      %c0_23 = arith.constant 0 : index
      %40 = vector.load %arg6[%c0_21, %c0_22, %c0_23] : memref<1x1x128xf32, #tpu.memory_space<vmem>>, vector<1x1x128xf32>
      %cst_24 = arith.constant dense<0xFF800000> : vector<128xf32>
      %41 = vector.multi_reduction <maximumf>, %25, %cst_24 [0] : vector<8x128xf32> to vector<128xf32>
      %42 = vector.shape_cast %41 : vector<128xf32> to vector<1x128xf32>
      %43 = vector.shape_cast %42 : vector<1x128xf32> to vector<1x1x128xf32>
      %44 = arith.maximumf %40, %43 : vector<1x1x128xf32>
      %45 = arith.subf %40, %44 : vector<1x1x128xf32>
      %46 = math.exp %45 : vector<1x1x128xf32>
      %47 = vector.shape_cast %44 : vector<1x1x128xf32> to vector<1x128xf32>
      %48 = vector.broadcast %47 : vector<1x128xf32> to vector<8x128xf32>
      %49 = arith.subf %25, %48 : vector<8x128xf32>
      %50 = math.exp %49 : vector<8x128xf32>
      %c0_25 = arith.constant 0 : index
      %c0_26 = arith.constant 0 : index
      %c0_27 = arith.constant 0 : index
      %51 = vector.load %arg7[%c0_25, %c0_26, %c0_27] : memref<1x1x128xf32, #tpu.memory_space<vmem>>, vector<1x1x128xf32>
      %52 = arith.mulf %46, %51 : vector<1x1x128xf32>
      %cst_28 = arith.constant dense<0.000000e+00> : vector<128xf32>
      %53 = vector.multi_reduction <add>, %50, %cst_28 [0] : vector<8x128xf32> to vector<128xf32>
      %54 = vector.shape_cast %53 : vector<128xf32> to vector<1x128xf32>
      %55 = vector.shape_cast %54 : vector<1x128xf32> to vector<1x1x128xf32>
      %56 = arith.addf %52, %55 : vector<1x1x128xf32>
      %c0_29 = arith.constant 0 : index
      %c0_30 = arith.constant 0 : index
      %c0_31 = arith.constant 0 : index
      %57 = vector.load %arg7[%c0_29, %c0_30, %c0_31] : memref<1x1x128xf32, #tpu.memory_space<vmem>>, vector<1x1x128xf32>
      tpu.vector_store %arg7[%c0_29, %c0_30, %c0_31], %56 {strides = array<i32>} : memref<1x1x128xf32, #tpu.memory_space<vmem>>, vector<1x1x128xf32>,
      %c0_32 = arith.constant 0 : index
      %c0_33 = arith.constant 0 : index
      %c0_34 = arith.constant 0 : index
      %58 = vector.load %arg8[%c0_32, %c0_33, %c0_34] : memref<1x1x128xf32, #tpu.memory_space<vmem>>, vector<1x1x128xf32>
      %59 = arith.mulf %46, %58 : vector<1x1x128xf32>
      %60 = arith.mulf %19, %50 : vector<8x128xf32>
      %cst_35 = arith.constant dense<0.000000e+00> : vector<128xf32>
      %61 = vector.multi_reduction <add>, %60, %cst_35 [0] : vector<8x128xf32> to vector<128xf32>
      %62 = vector.shape_cast %61 : vector<128xf32> to vector<1x128xf32>
      %63 = vector.shape_cast %62 : vector<1x128xf32> to vector<1x1x128xf32>
      %64 = arith.addf %59, %63 : vector<1x1x128xf32>
      %c0_36 = arith.constant 0 : index
      %c0_37 = arith.constant 0 : index
      %c0_38 = arith.constant 0 : index
      %65 = vector.load %arg8[%c0_36, %c0_37, %c0_38] : memref<1x1x128xf32, #tpu.memory_space<vmem>>, vector<1x1x128xf32>
      tpu.vector_store %arg8[%c0_36, %c0_37, %c0_38], %64 {strides = array<i32>} : memref<1x1x128xf32, #tpu.memory_space<vmem>>, vector<1x1x128xf32>,
      %c0_39 = arith.constant 0 : index
      %c0_40 = arith.constant 0 : index
      %c0_41 = arith.constant 0 : index
      %66 = vector.load %arg6[%c0_39, %c0_40, %c0_41] : memref<1x1x128xf32, #tpu.memory_space<vmem>>, vector<1x1x128xf32>
      tpu.vector_store %arg6[%c0_39, %c0_40, %c0_41], %44 {strides = array<i32>} : memref<1x1x128xf32, #tpu.memory_space<vmem>>, vector<1x1x128xf32>,
    } else {
    }
    %true = arith.constant true
    %31 = arith.xori %28, %true : i1
    %32 = arith.extui %31 : i1 to i32
    %c0_i32_13 = arith.constant 0 : i32
    %33 = arith.cmpi ne, %32, %c0_i32_13 : i32
    scf.if %33 {
      %34 = tpu.iota {dimensions = array<i32: 0>} : vector<8x128xi32>
      %35 = tpu.iota {dimensions = array<i32: 1>} : vector<8x128xi32>
      %c8_i32 = arith.constant 8 : i32
      %36 = arith.muli %1, %c8_i32 : i32
      %37 = vector.broadcast %36 : i32 to vector<8x128xi32>
      %38 = arith.addi %37, %34 : vector<8x128xi32>
      %c128_i32_14 = arith.constant 128 : i32
      %39 = vector.broadcast %c128_i32_14 : i32 to vector<8x128xi32>
      %40 = arith.muli %38, %39 : vector<8x128xi32>
      %41 = arith.addi %40, %35 : vector<8x128xi32>
      %c128_i32_15 = arith.constant 128 : i32
      %42 = vector.broadcast %c128_i32_15 : i32 to vector<8x128xi32>
      %43 = arith.cmpi slt, %41, %42 : vector<8x128xi32>
      %cst_16 = arith.constant 0.000000e+00 : f32
      %44 = vector.broadcast %cst_16 : f32 to vector<8x128xf32>
      %45 = arith.select %43, %19, %44 : vector<8x128xi1>, vector<8x128xf32>
      %cst_17 = arith.constant -1.000000e+30 : f32
      %46 = vector.broadcast %cst_17 : f32 to vector<8x128xf32>
      %47 = arith.select %43, %25, %46 : vector<8x128xi1>, vector<8x128xf32>
      %c0_18 = arith.constant 0 : index
      %c0_19 = arith.constant 0 : index
      %c0_20 = arith.constant 0 : index
      %48 = vector.load %arg5[%c0_18, %c0_19, %c0_20] : memref<1x1x128xf32, #tpu.memory_space<vmem>>, vector<1x1x128xf32>
      %cst_21 = arith.constant dense<0.000000e+00> : vector<128xf32>
      %49 = vector.multi_reduction <add>, %45, %cst_21 [0] : vector<8x128xf32> to vector<128xf32>
      %50 = vector.shape_cast %49 : vector<128xf32> to vector<1x128xf32>
      %51 = vector.shape_cast %50 : vector<1x128xf32> to vector<1x1x128xf32>
      %52 = arith.addf %48, %51 : vector<1x1x128xf32>
      %c0_22 = arith.constant 0 : index
      %c0_23 = arith.constant 0 : index
      %c0_24 = arith.constant 0 : index
      %53 = vector.load %arg5[%c0_22, %c0_23, %c0_24] : memref<1x1x128xf32, #tpu.memory_space<vmem>>, vector<1x1x128xf32>
      tpu.vector_store %arg5[%c0_22, %c0_23, %c0_24], %52 {strides = array<i32>} : memref<1x1x128xf32, #tpu.memory_space<vmem>>, vector<1x1x128xf32>,
      %c0_25 = arith.constant 0 : index
      %c0_26 = arith.constant 0 : index
      %c0_27 = arith.constant 0 : index
      %54 = vector.load %arg6[%c0_25, %c0_26, %c0_27] : memref<1x1x128xf32, #tpu.memory_space<vmem>>, vector<1x1x128xf32>
      %cst_28 = arith.constant dense<0xFF800000> : vector<128xf32>
      %55 = vector.multi_reduction <maximumf>, %47, %cst_28 [0] : vector<8x128xf32> to vector<128xf32>
      %56 = vector.shape_cast %55 : vector<128xf32> to vector<1x128xf32>
      %57 = vector.shape_cast %56 : vector<1x128xf32> to vector<1x1x128xf32>
      %58 = arith.maximumf %54, %57 : vector<1x1x128xf32>
      %59 = arith.subf %54, %58 : vector<1x1x128xf32>
      %60 = math.exp %59 : vector<1x1x128xf32>
      %61 = vector.shape_cast %58 : vector<1x1x128xf32> to vector<1x128xf32>
      %62 = vector.broadcast %61 : vector<1x128xf32> to vector<8x128xf32>
      %63 = arith.subf %47, %62 : vector<8x128xf32>
      %64 = math.exp %63 : vector<8x128xf32>
      %cst_29 = arith.constant 0.000000e+00 : f32
      %65 = vector.broadcast %cst_29 : f32 to vector<8x128xf32>
      %66 = arith.select %43, %64, %65 : vector<8x128xi1>, vector<8x128xf32>
      %c0_30 = arith.constant 0 : index
      %c0_31 = arith.constant 0 : index
      %c0_32 = arith.constant 0 : index
      %67 = vector.load %arg7[%c0_30, %c0_31, %c0_32] : memref<1x1x128xf32, #tpu.memory_space<vmem>>, vector<1x1x128xf32>
      %68 = arith.mulf %60, %67 : vector<1x1x128xf32>
      %cst_33 = arith.constant dense<0.000000e+00> : vector<128xf32>
      %69 = vector.multi_reduction <add>, %66, %cst_33 [0] : vector<8x128xf32> to vector<128xf32>
      %70 = vector.shape_cast %69 : vector<128xf32> to vector<1x128xf32>
      %71 = vector.shape_cast %70 : vector<1x128xf32> to vector<1x1x128xf32>
      %72 = arith.addf %68, %71 : vector<1x1x128xf32>
      %c0_34 = arith.constant 0 : index
      %c0_35 = arith.constant 0 : index
      %c0_36 = arith.constant 0 : index
      %73 = vector.load %arg7[%c0_34, %c0_35, %c0_36] : memref<1x1x128xf32, #tpu.memory_space<vmem>>, vector<1x1x128xf32>
      tpu.vector_store %arg7[%c0_34, %c0_35, %c0_36], %72 {strides = array<i32>} : memref<1x1x128xf32, #tpu.memory_space<vmem>>, vector<1x1x128xf32>,
      %c0_37 = arith.constant 0 : index
      %c0_38 = arith.constant 0 : index
      %c0_39 = arith.constant 0 : index
      %74 = vector.load %arg8[%c0_37, %c0_38, %c0_39] : memref<1x1x128xf32, #tpu.memory_space<vmem>>, vector<1x1x128xf32>
      %75 = arith.mulf %60, %74 : vector<1x1x128xf32>
      %76 = arith.mulf %45, %66 : vector<8x128xf32>
      %cst_40 = arith.constant dense<0.000000e+00> : vector<128xf32>
      %77 = vector.multi_reduction <add>, %76, %cst_40 [0] : vector<8x128xf32> to vector<128xf32>
      %78 = vector.shape_cast %77 : vector<128xf32> to vector<1x128xf32>
      %79 = vector.shape_cast %78 : vector<1x128xf32> to vector<1x1x128xf32>
      %80 = arith.addf %75, %79 : vector<1x1x128xf32>
      %c0_41 = arith.constant 0 : index
      %c0_42 = arith.constant 0 : index
      %c0_43 = arith.constant 0 : index
      %81 = vector.load %arg8[%c0_41, %c0_42, %c0_43] : memref<1x1x128xf32, #tpu.memory_space<vmem>>, vector<1x1x128xf32>
      tpu.vector_store %arg8[%c0_41, %c0_42, %c0_43], %80 {strides = array<i32>} : memref<1x1x128xf32, #tpu.memory_space<vmem>>, vector<1x1x128xf32>,
      %c0_44 = arith.constant 0 : index
      %c0_45 = arith.constant 0 : index
      %c0_46 = arith.constant 0 : index
      %82 = vector.load %arg6[%c0_44, %c0_45, %c0_46] : memref<1x1x128xf32, #tpu.memory_space<vmem>>, vector<1x1x128xf32>
      tpu.vector_store %arg6[%c0_44, %c0_45, %c0_46], %58 {strides = array<i32>} : memref<1x1x128xf32, #tpu.memory_space<vmem>>, vector<1x1x128xf32>,
    } else {
    }
    return
  }
  func.func @transform_0(%arg0: i32, %arg1: i32) -> (i32, i32) {
    %c1_i32 = arith.constant 1 : i32
    %0 = arith.muli %arg0, %c1_i32 : i32
    %1 = arith.addi %0, %arg1 : i32
    %c0_i32 = arith.constant 0 : i32
    %2 = arith.minsi %1, %c0_i32 : i32
    %c0_i32_0 = arith.constant 0 : i32
    %c0_i32_1 = arith.constant 0 : i32
    return %2, %c0_i32_0 : i32, i32
  }
  func.func @transform_1(%arg0: i32, %arg1: i32) -> (i32, i32) {
    %c1_i32 = arith.constant 1 : i32
    %0 = arith.muli %arg0, %c1_i32 : i32
    %1 = arith.addi %0, %arg1 : i32
    %c0_i32 = arith.constant 0 : i32
    %2 = arith.minsi %1, %c0_i32 : i32
    %c0_i32_0 = arith.constant 0 : i32
    %c0_i32_1 = arith.constant 0 : i32
    return %2, %c0_i32_0 : i32, i32
  }
  func.func @transform_2(%arg0: i32, %arg1: i32) -> (i32, i32) {
    %c1_i32 = arith.constant 1 : i32
    %0 = arith.muli %arg0, %c1_i32 : i32
    %1 = arith.addi %0, %arg1 : i32
    %c0_i32 = arith.constant 0 : i32
    %2 = arith.minsi %1, %c0_i32 : i32
    %c0_i32_0 = arith.constant 0 : i32
    %c0_i32_1 = arith.constant 0 : i32
    return %2, %c0_i32_0 : i32, i32
  }
  func.func @transform_3(%arg0: i32, %arg1: i32) -> (i32, i32, i32) {
    %c0_i32 = arith.constant 0 : i32
    %c0_i32_0 = arith.constant 0 : i32
    %c0_i32_1 = arith.constant 0 : i32
    return %arg0, %c0_i32, %c0_i32_0 : i32, i32, i32
  }
  func.func @transform_4(%arg0: i32, %arg1: i32) -> (i32, i32, i32) {
    %c0_i32 = arith.constant 0 : i32
    %c0_i32_0 = arith.constant 0 : i32
    %c0_i32_1 = arith.constant 0 : i32
    return %arg0, %c0_i32, %c0_i32_0 : i32, i32, i32
  }
  func.func @transform_5(%arg0: i32, %arg1: i32) -> (i32, i32, i32) {
    %c0_i32 = arith.constant 0 : i32
    %c0_i32_0 = arith.constant 0 : i32
    %c0_i32_1 = arith.constant 0 : i32
    return %arg0, %c0_i32, %c0_i32_0 : i32, i32, i32
  }
  func.func @transform_6(%arg0: i32, %arg1: i32) -> (i32, i32, i32) {
    %c0_i32 = arith.constant 0 : i32
    %c0_i32_0 = arith.constant 0 : i32
    %c0_i32_1 = arith.constant 0 : i32
    return %arg0, %c0_i32, %c0_i32_0 : i32, i32, i32
  }
}

</mosaic_0001>

<llo_original>
// kernel: tpu_custom_call.1
$region0: #{tpu_custom_call.1}
  #allocation0 [shape = 'u32[]', space=smem, size = 0x4, offset = 0x4, fixed_abs, tag = 'smem constant byte address 0x4 - core index']
  #allocation1 [shape = 'u32[144,128]{1,0:T(1,128)}', space=vmem, size = 0x12000, scoped, tag = 'internal scratch']
  %s0 = inlined_call_operand.hbm [shape: f32[1,128], index: 0, kind: input, shape index: {}]
  %s1 = inlined_call_operand.vmem [shape: f32[1,128], index: 1, kind: input, shape index: {}]
  %s2 = inlined_call_operand.vmem [shape: f32[1,128], index: 2, kind: input, shape index: {}]
  %s3 = inlined_call_operand.hbm [shape: f32[1,1,128], index: 3, kind: output, shape index: {0}]
  %s4 = inlined_call_operand.hbm [shape: f32[1,1,128], index: 4, kind: output, shape index: {1}]
  %s5 = inlined_call_operand.hbm [shape: f32[1,1,128], index: 5, kind: output, shape index: {2}]
  %s6 = inlined_call_operand.hbm [shape: f32[1,1,128], index: 6, kind: output, shape index: {3}]
  %7 = xla_tuple %s3, %s4, %s5, %s6
  %s8 = sld [smem:[#allocation0]]
  $region62: #{tpu_custom_call.1} parent=0
    _
  %s10 = ssub.s32 1, %s8
  %s11 = scalar_select 0, %s10, %s8
  $region1: #{tpu_custom_call.1} parent=0
    #allocation2 [shape = 'u8[4096]{0}', space=vmem, size = 0x1000, scoped, tag = 'input window, operand 0, single buffered']
    #allocation3 [shape = 's32[1]{0}', space=sflag, size = 0x4, scoped, tag = 'scoped memory for tpu_custom_call.1']
    #allocation4 [shape = 's32[1]{0}', space=sflag, size = 0x4, scoped, tag = 'scoped memory for tpu_custom_call.1']
    #allocation5 [shape = 'u8[512]{0}', space=vmem, size = 0x400, scoped, tag = 'output window, operand 0, single buffered']
    #allocation6 [shape = 'u8[512]{0}', space=vmem, size = 0x400, scoped, tag = 'output window, operand 1, single buffered']
    #allocation7 [shape = 's32[1]{0}', space=sflag, size = 0x4, scoped, tag = 'scoped memory for tpu_custom_call.1']
    #allocation8 [shape = 'u8[512]{0}', space=vmem, size = 0x400, scoped, tag = 'output window, operand 2, single buffered']
    #allocation9 [shape = 'u8[512]{0}', space=vmem, size = 0x400, scoped, tag = 'output window, operand 3, single buffered']
    #allocation10 [shape = 's32[1]{0}', space=sflag, size = 0x4, scoped, tag = 'scoped memory for tpu_custom_call.1']
    %12 = vsyncpa [#allocation3], 0
    %13 = vsyncpa [#allocation4], 0
    %14 = vsyncpa [#allocation7], 0
    %15 = vsyncpa [#allocation10], 0
    // Predicated region
    $region2: #{tpu_custom_call.1} parent=1 // pred_check
      _
    $region3: #{tpu_custom_call.1} parent=1 // pred_check_branch
      %17 = sbr.rel (0) target = $region5
    $region4: #{tpu_custom_call.1} parent=1 // pred_region
      %s18 = sadd.s32 0, 0
      %p19 = scmp.lt.s32.totalorder %s18, 0
      %s20 = scalar_select %p19, %s18, 0
      %s21 = smul.u32 8, %s20
      %s22 = ssub.s32 1, %s21
      %s23 = smul.u32 16, %s22
      %s25 = ssub.s32 128, %s23
      %26 = vsyncadd [#allocation3], %s25
      %p27 = scmp.ne.s32.totalorder 0, %s23
      %s28 = smul.addr %s21, 16
      %s29 = scalar_lea.hbm %s0, %s28
      %s30 = sshll.u32 [#allocation2], 4
      %s31 = int_to_ptr.vmem [resolvable:$true] %s30
      %s32 = sshll.u32 %s22, 4
      %36 = dma.hbm_to_vmem [thread:$0]  (%p27), %s29, %s32, %s31, [#allocation3], 16, 16, 1
    $region5: #{tpu_custom_call.1} parent=1 // pred_fallthru
      _
    // Predicated region
    $region6: #{tpu_custom_call.1} parent=1 // pred_check
      _
    $region7: #{tpu_custom_call.1} parent=1 // pred_check_branch
      %38 = sbr.rel (0) target = $region9
    $region8: #{tpu_custom_call.1} parent=1 // pred_region
      %s39 = sadd.s32 0, 0
      %p40 = scmp.lt.s32.totalorder %s39, 0
      %s41 = scalar_select %p40, %s39, 0
      %s42 = smul.u32 8, %s41
      %s43 = ssub.s32 1, %s42
      %s44 = smul.u32 16, %s43
      %p45 = scmp.lt.s32.totalorder %s42, 0
      %s46 = scalar_select %p45, %s42, 0
      %s47 = scalar_lea.vmem %s1, %s46
      %s48 = sadd.s32 0, 0
      %p49 = scmp.lt.s32.totalorder %s48, 0
      %s50 = scalar_select %p49, %s48, 0
      %s51 = smul.u32 8, %s50
      %s52 = ssub.s32 1, %s51
      %s53 = smul.u32 16, %s52
    $region9: #{tpu_custom_call.1} parent=1 // pred_fallthru
      _
    // Predicated region
    $region10: #{tpu_custom_call.1} parent=1 // pred_check
      _
    $region11: #{tpu_custom_call.1} parent=1 // pred_check_branch
      %55 = sbr.rel (0) target = $region13
    $region12: #{tpu_custom_call.1} parent=1 // pred_region
      %s56 = sadd.s32 0, 0
      %p57 = scmp.lt.s32.totalorder %s56, 0
      %s58 = scalar_select %p57, %s56, 0
      %s59 = smul.u32 8, %s58
      %s60 = ssub.s32 1, %s59
      %s61 = smul.u32 16, %s60
      %p62 = scmp.lt.s32.totalorder %s59, 0
      %s63 = scalar_select %p62, %s59, 0
      %s64 = scalar_lea.vmem %s2, %s63
      %s65 = sadd.s32 0, 0
      %p66 = scmp.lt.s32.totalorder %s65, 0
      %s67 = scalar_select %p66, %s65, 0
      %s68 = smul.u32 8, %s67
      %s69 = ssub.s32 1, %s68
      %s70 = smul.u32 16, %s69
    $region13: #{tpu_custom_call.1} parent=1 // pred_fallthru
      _
    // Predicated region
    $region14: #{tpu_custom_call.1} parent=1 // pred_check
      _
    $region15: #{tpu_custom_call.1} parent=1 // pred_check_branch
      %72 = sbr.rel (0) target = $region17
    $region16: #{tpu_custom_call.1} parent=1 // pred_region
      %73 = dma.done [#allocation3], 128
    $region17: #{tpu_custom_call.1} parent=1 // pred_fallthru
      _
    %s74 = sadd.s32 0, 0
    %p75 = scmp.lt.s32.totalorder %s74, 0
    %s76 = scalar_select %p75, %s74, 0
    %s77 = smul.u32 8, %s76
    %s78 = ssub.s32 1, %s77
    %s79 = smul.u32 16, %s78
    %p80 = scmp.lt.s32.totalorder %s77, 0
    %s81 = scalar_select %p80, %s77, 0
    %s82 = scalar_lea.vmem %s1, %s81
    %s83 = sadd.s32 0, 0
    %p84 = scmp.lt.s32.totalorder %s83, 0
    %s85 = scalar_select %p84, %s83, 0
    %s86 = smul.u32 8, %s85
    %s87 = ssub.s32 1, %s86
    %s88 = smul.u32 16, %s87
    %p89 = scmp.lt.s32.totalorder %s86, 0
    %s90 = scalar_select %p89, %s86, 0
    %s91 = scalar_lea.vmem %s2, %s90
    %s92 = sadd.s32 0, 0
    %p93 = scmp.lt.s32.totalorder %s92, 0
    %s94 = scalar_select %p93, %s92, 0
    %s95 = smul.u32 8, %s94
    %s96 = ssub.s32 1, %s95
    %s97 = smul.u32 16, %s96
    %s98 = sadd.s32 0, 0
    %p99 = scmp.lt.s32.totalorder %s98, 0
    %s100 = scalar_select %p99, %s98, 0
    %s101 = smul.u32 8, %s100
    %s102 = ssub.s32 1, %s101
    %s103 = smul.u32 16, %s102
    %p104 = scmp.lt.s32.totalorder %s101, 0
    %s105 = scalar_select %p104, %s101, 0
    %s106 = scalar_lea.vmem %s1, %s105
    %s107 = sadd.s32 0, 0
    %p108 = scmp.lt.s32.totalorder %s107, 0
    %s109 = scalar_select %p108, %s107, 0
    %s110 = smul.u32 8, %s109
    %s111 = ssub.s32 1, %s110
    %s112 = smul.u32 16, %s111
    %s113 = sadd.s32 0, 0
    %p114 = scmp.lt.s32.totalorder %s113, 0
    %s115 = scalar_select %p114, %s113, 0
    %s116 = smul.u32 8, %s115
    %s117 = ssub.s32 1, %s116
    %s118 = smul.u32 16, %s117
    %p119 = scmp.lt.s32.totalorder %s116, 0
    %s120 = scalar_select %p119, %s116, 0
    %s121 = scalar_lea.vmem %s2, %s120
    %s122 = sadd.s32 0, 0
    %p123 = scmp.lt.s32.totalorder %s122, 0
    %s124 = scalar_select %p123, %s122, 0
    %s125 = smul.u32 8, %s124
    %s126 = ssub.s32 1, %s125
    %s127 = smul.u32 16, %s126
    %s128 = sadd.s32 0, 0
    %p129 = scmp.eq.s32.totalorder 0, 0
    // Predicated region
    $region18: #{tpu_custom_call.1} parent=1 // pred_check
      %p130 = pneg %p129
    $region19: #{tpu_custom_call.1} parent=1 // pred_check_branch
      %132 = sbr.rel (%p130) target = $region21
    $region20: #{tpu_custom_call.1} parent=1 // pred_region
      %133 = vst [vmem:[#allocation5] sm:$0x1] 0.0
      %134 = vst [vmem:[#allocation6] sm:$0x1] -1e+30
      %135 = vst [vmem:[#allocation8] sm:$0x1] 0.0
      %136 = vst [vmem:[#allocation9] sm:$0x1] 0.0
    $region21: #{tpu_custom_call.1} parent=1 // pred_fallthru
      _
    %v137 = vld [vmem:[#allocation2] sm:$0xff]
    %v138 = vld [vmem:[%s106] sm:$0xff]
    %v139 = vld [vmem:[%s121] sm:$0xff]
    %v140 = vmax.f32 %v137, 0.0
    %v141 = vmul.f32 %v137, %v138
    %v142 = vsub.f32 %v140, %v141
    %v143 = vand.u32 2147483647, %v137
    %v144 = vsub.f32 0.0, %v143
    %v145 = vmul.f32 %v144, 1.442695
    %v146 = vpow.pop %v145
    %v147 = vadd.f32 %v146, 1.0
    %v148 = vlog2.pop %v147
    %v149 = vmul.f32 %v148, 0.6931472
    %v150 = vmul.f32 -0.5, %v146
    %v151 = vadd.f32 %v150, 1.0
    %v152 = vmul.f32 %v151, %v146
    %v153 = vand.u32 2147483647, %v146
    %vm154 = vcmp.lt.f32.partialorder %v153, 0.0004427343
    %v155 = vsel %vm154, %v152, %v149
    %v156 = vadd.f32 %v142, %v155
    %v157 = vmin.f32 %v156, 100.0
    %v158 = vmul.f32 %v139, 0.1
    %v159 = vadd.f32 %v158, 0.05
    %v160 = vsub.f32 1.0, %v159
    %s161 = sadd.s32 %s128, 1
    %s162 = smul.u32 %s161, 1024
    %p163 = scmp.le.s32.totalorder %s162, 128
    // Predicated region
    $region22: #{tpu_custom_call.1} parent=1 // pred_check
      %p164 = pneg %p163
    $region23: #{tpu_custom_call.1} parent=1 // pred_check_branch
      %166 = sbr.rel (%p164) target = $region25
    $region24: #{tpu_custom_call.1} parent=1 // pred_region
      %v167 = vld [vmem:[#allocation5] sm:$0x1]
      %v168 = vrot.slane %v157, 4
      %v169 = vadd.f32 %v157, %v168
      %v170 = vrot.slane %v169, 2
      %v171 = vadd.f32 %v169, %v170
      %v172 = vrot.slane %v171, 1
      %v173 = vadd.f32 %v171, %v172
      %v174 = vadd.f32 %v167, %v173
      %175 = vst [vmem:[#allocation5] sm:$0x1] %v174
      %v176 = vld [vmem:[#allocation6] sm:$0x1]
      %v177 = vrot.slane %v160, 4
      %v178 = vmax.f32 %v160, %v177
      %v179 = vrot.slane %v178, 2
      %v180 = vmax.f32 %v178, %v179
      %v181 = vrot.slane %v180, 1
      %v182 = vmax.f32 %v180, %v181
      %v183 = vmax.f32 %v176, %v182
      %v184 = vsub.f32 %v176, %v183
      %v185 = vmul.f32 %v184, 1.442695
      %v186 = vpow.pop %v185
      %v188 = vlaneseq
      %v189 = vshrl.u32 %v188, 7
      %v190 = vsub.s32 0, %v189
      %v191 = vrot.slane %v183, %v190
      %v193 = vsub.f32 %v160, %v191
      %v194 = vmul.f32 %v193, 1.442695
      %v195 = vpow.pop %v194
      %v196 = vld [vmem:[#allocation8] sm:$0x1]
      %v197 = vmul.f32 %v186, %v196
      %v198 = vrot.slane %v195, 4
      %v199 = vadd.f32 %v195, %v198
      %v200 = vrot.slane %v199, 2
      %v201 = vadd.f32 %v199, %v200
      %v202 = vrot.slane %v201, 1
      %v203 = vadd.f32 %v201, %v202
      %v204 = vadd.f32 %v197, %v203
      %205 = vst [vmem:[#allocation8] sm:$0x1] %v204
      %v206 = vld [vmem:[#allocation9] sm:$0x1]
      %v207 = vmul.f32 %v186, %v206
      %v208 = vmul.f32 %v157, %v195
      %v209 = vrot.slane %v208, 4
      %v210 = vadd.f32 %v208, %v209
      %v211 = vrot.slane %v210, 2
      %v212 = vadd.f32 %v210, %v211
      %v213 = vrot.slane %v212, 1
      %v214 = vadd.f32 %v212, %v213
      %v215 = vadd.f32 %v207, %v214
      %216 = vst [vmem:[#allocation9] sm:$0x1] %v215
      %217 = vst [vmem:[#allocation6] sm:$0x1] %v183
    $region25: #{tpu_custom_call.1} parent=1 // pred_fallthru
      _
    %p218 = scmp.gt.s32.totalorder %s162, 128
    // Predicated region
    $region26: #{tpu_custom_call.1} parent=1 // pred_check
      %p219 = pneg %p218
    $region27: #{tpu_custom_call.1} parent=1 // pred_check_branch
      %221 = sbr.rel (%p219) target = $region29
    $region28: #{tpu_custom_call.1} parent=1 // pred_region
      %v222 = vlaneseq
      %v223 = vshrl.u32 %v222, 7
      %v224 = vlaneseq
      %v225 = vand.u32 %v224, 127
      %s226 = smul.u32 %s128, 8
      %v227 = vstv %s226
      %v228 = vadd.s32 %v227, %v223
      %v229 = vmul.u32 %v228, 128
      %v230 = vadd.s32 %v229, %v225
      %vm231 = vcmp.lt.s32.totalorder %v230, 128
      %v232 = vsel %vm231, %v157, 0.0
      %v233 = vsel %vm231, %v160, -1e+30
      %v234 = vld [vmem:[#allocation5] sm:$0x1]
      %v235 = vrot.slane %v232, 4
      %v236 = vadd.f32 %v232, %v235
      %v237 = vrot.slane %v236, 2
      %v238 = vadd.f32 %v236, %v237
      %v239 = vrot.slane %v238, 1
      %v240 = vadd.f32 %v238, %v239
      %v241 = vadd.f32 %v234, %v240
      %242 = vst [vmem:[#allocation5] sm:$0x1] %v241
      %v243 = vld [vmem:[#allocation6] sm:$0x1]
      %v244 = vrot.slane %v233, 4
      %v245 = vmax.f32 %v233, %v244
      %v246 = vrot.slane %v245, 2
      %v247 = vmax.f32 %v245, %v246
      %v248 = vrot.slane %v247, 1
      %v249 = vmax.f32 %v247, %v248
      %v250 = vmax.f32 %v243, %v249
      %v251 = vsub.f32 %v243, %v250
      %v252 = vmul.f32 %v251, 1.442695
      %v253 = vpow.pop %v252
      %v255 = vlaneseq
      %v256 = vshrl.u32 %v255, 7
      %v257 = vsub.s32 0, %v256
      %v258 = vrot.slane %v250, %v257
      %v260 = vsub.f32 %v233, %v258
      %v261 = vmul.f32 %v260, 1.442695
      %v262 = vpow.pop %v261
      %v263 = vsel %vm231, %v262, 0.0
      %v264 = vld [vmem:[#allocation8] sm:$0x1]
      %v265 = vmul.f32 %v253, %v264
      %v266 = vrot.slane %v263, 4
      %v267 = vadd.f32 %v263, %v266
      %v268 = vrot.slane %v267, 2
      %v269 = vadd.f32 %v267, %v268
      %v270 = vrot.slane %v269, 1
      %v271 = vadd.f32 %v269, %v270
      %v272 = vadd.f32 %v265, %v271
      %273 = vst [vmem:[#allocation8] sm:$0x1] %v272
      %v274 = vld [vmem:[#allocation9] sm:$0x1]
      %v275 = vmul.f32 %v253, %v274
      %v276 = vmul.f32 %v232, %v263
      %v277 = vrot.slane %v276, 4
      %v278 = vadd.f32 %v276, %v277
      %v279 = vrot.slane %v278, 2
      %v280 = vadd.f32 %v278, %v279
      %v281 = vrot.slane %v280, 1
      %v282 = vadd.f32 %v280, %v281
      %v283 = vadd.f32 %v275, %v282
      %284 = vst [vmem:[#allocation9] sm:$0x1] %v283
      %285 = vst [vmem:[#allocation6] sm:$0x1] %v250
    $region29: #{tpu_custom_call.1} parent=1 // pred_fallthru
      _
    // Predicated region
    $region30: #{tpu_custom_call.1} parent=1 // pred_check
      _
    $region31: #{tpu_custom_call.1} parent=1 // pred_check_branch
      %287 = sbr.rel (0) target = $region33
    $region32: #{tpu_custom_call.1} parent=1 // pred_region
      %s289 = ssub.s32 16, 16
      %290 = vsyncadd [#allocation4], %s289
      %s292 = sshll.u32 [#allocation5], 4
      %s293 = int_to_ptr.vmem [resolvable:$true] %s292
      %295 = dma.vmem_to_hbm [thread:$0]  %s293, 16, %s3, [#allocation4]
    $region33: #{tpu_custom_call.1} parent=1 // pred_fallthru
      _
    // Predicated region
    $region34: #{tpu_custom_call.1} parent=1 // pred_check
      _
    $region35: #{tpu_custom_call.1} parent=1 // pred_check_branch
      %297 = sbr.rel (0) target = $region37
    $region36: #{tpu_custom_call.1} parent=1 // pred_region
      %s299 = ssub.s32 16, 16
      %300 = vsyncadd [#allocation7], %s299
      %s302 = sshll.u32 [#allocation6], 4
      %s303 = int_to_ptr.vmem [resolvable:$true] %s302
      %305 = dma.vmem_to_hbm [thread:$0]  %s303, 16, %s4, [#allocation7]
    $region37: #{tpu_custom_call.1} parent=1 // pred_fallthru
      _
    // Predicated region
    $region38: #{tpu_custom_call.1} parent=1 // pred_check
      _
    $region39: #{tpu_custom_call.1} parent=1 // pred_check_branch
      %307 = sbr.rel (0) target = $region41
    $region40: #{tpu_custom_call.1} parent=1 // pred_region
      %s309 = ssub.s32 16, 16
      %310 = vsyncadd [#allocation7], %s309
      %s312 = sshll.u32 [#allocation8], 4
      %s313 = int_to_ptr.vmem [resolvable:$true] %s312
      %315 = dma.vmem_to_hbm [thread:$0]  %s313, 16, %s5, [#allocation7]
    $region41: #{tpu_custom_call.1} parent=1 // pred_fallthru
      _
    // Predicated region
    $region42: #{tpu_custom_call.1} parent=1 // pred_check
      _
    $region43: #{tpu_custom_call.1} parent=1 // pred_check_branch
      %317 = sbr.rel (0) target = $region45
    $region44: #{tpu_custom_call.1} parent=1 // pred_region
      %s319 = ssub.s32 16, 16
      %320 = vsyncadd [#allocation10], %s319
      %s322 = sshll.u32 [#allocation9], 4
      %s323 = int_to_ptr.vmem [resolvable:$true] %s322
      %325 = dma.vmem_to_hbm [thread:$0]  %s323, 16, %s6, [#allocation10]
    $region45: #{tpu_custom_call.1} parent=1 // pred_fallthru
      _
    // Predicated region
    $region46: #{tpu_custom_call.1} parent=1 // pred_check
      _
    $region47: #{tpu_custom_call.1} parent=1 // pred_check_branch
      %327 = sbr.rel (0) target = $region49
    $region48: #{tpu_custom_call.1} parent=1 // pred_region
      %328 = dma.done [#allocation4], 16
    $region49: #{tpu_custom_call.1} parent=1 // pred_fallthru
      _
    // Predicated region
    $region50: #{tpu_custom_call.1} parent=1 // pred_check
      _
    $region51: #{tpu_custom_call.1} parent=1 // pred_check_branch
      %330 = sbr.rel (0) target = $region53
    $region52: #{tpu_custom_call.1} parent=1 // pred_region
      %331 = dma.done [#allocation7], 16
    $region53: #{tpu_custom_call.1} parent=1 // pred_fallthru
      _
    // Predicated region
    $region54: #{tpu_custom_call.1} parent=1 // pred_check
      _
    $region55: #{tpu_custom_call.1} parent=1 // pred_check_branch
      %333 = sbr.rel (0) target = $region57
    $region56: #{tpu_custom_call.1} parent=1 // pred_region
      %334 = dma.done [#allocation7], 16
    $region57: #{tpu_custom_call.1} parent=1 // pred_fallthru
      _
    // Predicated region
    $region58: #{tpu_custom_call.1} parent=1 // pred_check
      _
    $region59: #{tpu_custom_call.1} parent=1 // pred_check_branch
      %336 = sbr.rel (0) target = $region61
    $region60: #{tpu_custom_call.1} parent=1 // pred_region
      %337 = dma.done [#allocation10], 16
    $region61: #{tpu_custom_call.1} parent=1 // pred_fallthru
      _
    %338 = vsyncpa [#allocation3], 1
    %339 = vsyncpa [#allocation4], 1
    %340 = vsyncpa [#allocation7], 1
    %341 = vsyncpa [#allocation10], 1

</llo_original>
